<compile_context>
chip_gen: v6e
topology: v6e:2x2x1
jax: 0.10.0
libtpu: 0.0.40
codegen_flags: <defaults>
</compile_context>

<pallas_src>
import jax
import jax.numpy as jnp
from jax.experimental import pallas as pl
from jax.experimental.pallas import tpu as pltpu


def _round_up(x, m):
    return ((x + m - 1) // m) * m


def _make_cbow_kernel(nv, tv, write_probs):
    """Build the CBOW kernel for nv vocab tiles of width tv."""

    def kernel(ctx_ref, emb_ref, wt_ref, b_ref, *refs):
        # ctx_ref : (B, C) int32 in SMEM (scalar prefetch)
        # emb_ref : (V, E) f32  embedding table, resident in VMEM
        # wt_ref  : (E, tv) bf16 weight tile (pre-transposed, streamed)
        # b_ref   : (1, tv) f32  bias tile (streamed)
        if write_probs:
            logp_ref, prob_ref = refs[0], refs[1]
            add_ref, m_ref, l_ref, logits_ref = refs[2], refs[3], refs[4], refs[5]
        else:
            logp_ref, prob_ref = refs[0], None
            add_ref, m_ref, l_ref, logits_ref = refs[1], refs[2], refs[3], refs[4]

        j = pl.program_id(0)
        B, C = ctx_ref.shape
        V_emb, E = emb_ref.shape

        # --- first vocab tile: gather + sum context embeddings, init stats ---
        @pl.when(j == 0)
        def _init():
            m_ref[...] = jnp.full_like(m_ref, -jnp.inf)
            l_ref[...] = jnp.zeros_like(l_ref)
            for bb in range(B):                       # B*C is small & static
                row = jnp.zeros((1, E), jnp.float32)
                for cc in range(C):
                    # Guard out-of-range ids (PyTorch would raise instead).
                    tok = jnp.clip(ctx_ref[bb, cc], 0, V_emb - 1)
                    row = row + emb_ref[pl.ds(tok, 1), :]
                add_ref[bb:bb + 1, :] = row

        # --- logits for this vocab tile (MXU: bf16 in, f32 accumulate) ---
        logits = jnp.dot(add_ref[...].astype(jnp.bfloat16), wt_ref[...],
                         preferred_element_type=jnp.float32) + b_ref[...]
        logits_ref[j] = logits                        # stash tile for finalize

        # --- online softmax statistics (f32) ---
        t_max = jnp.max(logits, axis=1, keepdims=True)
        m_new = jnp.maximum(m_ref[...], t_max)
        l_ref[...] = (l_ref[...] * jnp.exp(m_ref[...] - m_new)
                      + jnp.sum(jnp.exp(logits - m_new), axis=1, keepdims=True))
        m_ref[...] = m_new

        # --- last vocab tile: normalize all stashed tiles, write outputs ---
        @pl.when(j == nv - 1)
        def _finalize():
            lse = m_ref[...] + jnp.log(l_ref[...])    # (B, 1)
            for t in range(nv):                       # static unroll, static slices
                logp_t = logits_ref[t] - lse
                logp_ref[:, t * tv:(t + 1) * tv] = logp_t
                if write_probs:
                    prob_ref[:, t * tv:(t + 1) * tv] = jnp.exp(logp_t)

    return kernel


def cbow_forward(contexts, emb_table, w, b, get_prob=False, tile_v=256):
    """CBOW forward pass. contexts: (B, C) int ids. Returns log_probs[, probs]."""
    B, C = contexts.shape
    V, E = emb_table.shape

    # Vocab tiling (lane-aligned); pad V up to a multiple of the tile width.
    tv = min(tile_v, _round_up(V, 128))
    v_pad = _round_up(V, tv)
    nv = v_pad // tv

    emb_f32 = emb_table.astype(jnp.float32)           # gather source (resident)
    # Pre-transpose W ONCE outside the kernel: (V, E) -> (E, V), bf16 for MXU.
    wt = jnp.transpose(w).astype(jnp.bfloat16)        # (E, V)
    bias = b.reshape(1, V).astype(jnp.float32)
    if v_pad != V:
        wt = jnp.pad(wt, ((0, 0), (0, v_pad - V)))
        # Large negative bias on padded columns -> they vanish in softmax.
        bias = jnp.pad(bias, ((0, 0), (0, v_pad - V)), constant_values=-1e30)

    one_out = jax.ShapeDtypeStruct((B, v_pad), jnp.float32)
    if get_prob:
        out_shapes = (one_out, one_out)
        out_specs = (pl.BlockSpec((B, v_pad), lambda j, ctx: (0, 0)),
                     pl.BlockSpec((B, v_pad), lambda j, ctx: (0, 0)))
    else:
        out_shapes = one_out
        out_specs = pl.BlockSpec((B, v_pad), lambda j, ctx: (0, 0))

    grid_spec = pltpu.PrefetchScalarGridSpec(
        num_scalar_prefetch=1,                        # contexts -> SMEM
        grid=(nv,),
        in_specs=[
            # Embedding table resident in VMEM (fetched once: constant index map).
            # TODO(synk): for very large V, leave the table in HBM
            # (memory_space=pl.ANY) and gather rows with pltpu.make_async_copy.
            pl.BlockSpec((V, E), lambda j, ctx: (0, 0)),
            pl.BlockSpec((E, tv), lambda j, ctx: (0, j)),   # W^T tile (streamed)
            pl.BlockSpec((1, tv), lambda j, ctx: (0, j)),   # bias tile (streamed)
        ],
        out_specs=out_specs,
        scratch_shapes=[
            pltpu.VMEM((B, E), jnp.float32),          # summed context embeddings
            pltpu.VMEM((B, 1), jnp.float32),          # running max
            pltpu.VMEM((B, 1), jnp.float32),          # running sum(exp)
            pltpu.VMEM((nv, B, tv), jnp.float32),     # stashed logits tiles
        ],
    )

    # Rough VMEM budget (resident emb + double-buffered tiles + outputs + scratch),
    # clamped so it also fits v7x's 64 MiB VMEM.
    vmem_est = (V * E * 4 + 2 * (E * tv * 2 + tv * 4)
                + (2 if get_prob else 1) * B * v_pad * 4
                + B * E * 4 + 2 * B * 4 + nv * B * tv * 4)
    compiler_params = pltpu.CompilerParams(
        # Online softmax + resident output => vocab axis is a reduction.
        dimension_semantics=("arbitrary",),
        vmem_limit_bytes=int(min(max(4 * vmem_est, 16 * 1024 * 1024),
                                 48 * 1024 * 1024)),
    )

    out = pl.pallas_call(
        _make_cbow_kernel(nv, tv, get_prob),
        out_shape=out_shapes,
        grid_spec=grid_spec,
        compiler_params=compiler_params,
    )(contexts.astype(jnp.int32), emb_f32, wt, bias)

    if get_prob:
        log_probs, probs = out
        return log_probs[:, :V], probs[:, :V]
    return out[:, :V]


if __name__ == "__main__":
    # Small, module-consistent shapes.
    vocabulary_size = 512
    embedding_dim = 64
    batch = 8
    context_size = 4   # e.g. window of 2 on each side

    key = jax.random.PRNGKey(0)
    k_emb, k_w, k_b, k_ctx = jax.random.split(key, 4)

    # Mirror the PyTorch module's __init__:
    #   embeddings.weight ~ U(-0.5/E, 0.5/E); Linear ~ U(-1/sqrt(E), 1/sqrt(E))
    initrange = 0.5 / embedding_dim
    emb_table = jax.random.uniform(
        k_emb, (vocabulary_size, embedding_dim),
        minval=-initrange, maxval=initrange, dtype=jnp.float32)
    bound = 1.0 / (embedding_dim ** 0.5)
    w = jax.random.uniform(
        k_w, (vocabulary_size, embedding_dim),
        minval=-bound, maxval=bound, dtype=jnp.float32)
    b = jax.random.uniform(
        k_b, (vocabulary_size,), minval=-bound, maxval=bound, dtype=jnp.float32)
    contexts = jax.random.randint(
        k_ctx, (batch, context_size), 0, vocabulary_size, dtype=jnp.int32)

    # Default path: log_probs only (single (B, V) writeback).
    log_probs = cbow_forward(contexts, emb_table, w, b, get_prob=False)
    # get_prob path: log_probs + probs.
    log_probs2, probs = cbow_forward(contexts, emb_table, w, b, get_prob=True)
    jax.block_until_ready((log_probs, log_probs2, probs))

    # Pure-JAX f32 reference.
    ref_add = jnp.sum(emb_table[contexts], axis=1)            # (B, E)
    ref_logits = ref_add @ w.T + b
    ref_logp = jax.nn.log_softmax(ref_logits, axis=1)
    ref_prob = jax.nn.softmax(ref_logits, axis=1)

    assert log_probs.shape == (batch, vocabulary_size)
    # bf16 MXU inputs -> tolerance covers bf16 rounding of the matmul.
    assert jnp.allclose(log_probs, ref_logp, atol=5e-3), "log_probs mismatch"
    assert jnp.allclose(log_probs2, ref_logp, atol=5e-3), "log_probs(get_prob) mismatch"
    assert jnp.allclose(probs, ref_prob, atol=1e-4), "probs mismatch"

    print("KERNEL_OK")
</pallas_src>

<mosaic_0001>
module attributes {stable_mosaic.version = 11 : i64} {
  func.func @kernel(%arg0: i32, %arg1: memref<8x4xi32, #tpu.memory_space<smem>>, %arg2: memref<512x64xf32, #tpu.memory_space<vmem>>, %arg3: memref<64x256xbf16, #tpu.memory_space<vmem>>, %arg4: memref<1x256xf32, #tpu.memory_space<vmem>>, %arg5: memref<8x512xf32, #tpu.memory_space<vmem>>, %arg6: memref<8x64xf32, #tpu.memory_space<vmem>>, %arg7: memref<8x1xf32, #tpu.memory_space<vmem>>, %arg8: memref<8x1xf32, #tpu.memory_space<vmem>>, %arg9: memref<2x8x256xf32, #tpu.memory_space<vmem>>) attributes {dimension_semantics = [#tpu.dimension_semantics<arbitrary>], iteration_bounds = array<i64: 2>, scalar_prefetch = 1 : i64, scratch_operands = 4 : i64, tpu.core_type = #tpu.core_type<tc>, window_params = [{pipeline_mode = #tpu.pipeline_mode<synchronous>, transform_indices = @transform_0, window_bounds = array<i64: 512, 64>}, {transform_indices = @transform_1, window_bounds = array<i64: 64, 256>}, {transform_indices = @transform_2, window_bounds = array<i64: 1, 256>}, {pipeline_mode = #tpu.pipeline_mode<synchronous>, transform_indices = @transform_3, window_bounds = array<i64: 8, 512>}]} {
    %c0_i32 = arith.constant 0 : i32
    %0 = arith.cmpi eq, %arg0, %c0_i32 : i32
    %1 = arith.extui %0 : i1 to i32
    %c0_i32_0 = arith.constant 0 : i32
    %2 = arith.cmpi ne, %1, %c0_i32_0 : i32
    scf.if %2 {
      %cst_21 = arith.constant 0xFF800000 : f32
      %34 = vector.broadcast %cst_21 : f32 to vector<8x1xf32>
      %c0_22 = arith.constant 0 : index
      %c0_23 = arith.constant 0 : index
      %35 = vector.load %arg7[%c0_22, %c0_23] : memref<8x1xf32, #tpu.memory_space<vmem>>, vector<8x1xf32>
      tpu.vector_store %arg7[%c0_22, %c0_23], %34 {strides = array<i32>} : memref<8x1xf32, #tpu.memory_space<vmem>>, vector<8x1xf32>,
      %cst_24 = arith.constant 0.000000e+00 : f32
      %36 = vector.broadcast %cst_24 : f32 to vector<8x1xf32>
      %c0_25 = arith.constant 0 : index
      %c0_26 = arith.constant 0 : index
      %37 = vector.load %arg8[%c0_25, %c0_26] : memref<8x1xf32, #tpu.memory_space<vmem>>, vector<8x1xf32>
      tpu.vector_store %arg8[%c0_25, %c0_26], %36 {strides = array<i32>} : memref<8x1xf32, #tpu.memory_space<vmem>>, vector<8x1xf32>,
      %cst_27 = arith.constant 0.000000e+00 : f32
      %38 = vector.broadcast %cst_27 : f32 to vector<1x64xf32>
      %c0_28 = arith.constant 0 : index
      %c0_29 = arith.constant 0 : index
      %39 = memref.load %arg1[%c0_28, %c0_29] : memref<8x4xi32, #tpu.memory_space<smem>>
      %c0_i32_30 = arith.constant 0 : i32
      %c511_i32 = arith.constant 511 : i32
      %40 = arith.maxsi %c0_i32_30, %39 : i32
      %41 = arith.minsi %c511_i32, %40 : i32
      %42 = arith.index_cast %41 : i32 to index
      %c0_31 = arith.constant 0 : index
      %43 = vector.load %arg2[%42, %c0_31] : memref<512x64xf32, #tpu.memory_space<vmem>>, vector<1x64xf32>
      %44 = arith.addf %38, %43 : vector<1x64xf32>
      %c0_32 = arith.constant 0 : index
      %c1 = arith.constant 1 : index
      %45 = memref.load %arg1[%c0_32, %c1] : memref<8x4xi32, #tpu.memory_space<smem>>
      %c0_i32_33 = arith.constant 0 : i32
      %c511_i32_34 = arith.constant 511 : i32
      %46 = arith.maxsi %c0_i32_33, %45 : i32
      %47 = arith.minsi %c511_i32_34, %46 : i32
      %48 = arith.index_cast %47 : i32 to index
      %c0_35 = arith.constant 0 : index
      %49 = vector.load %arg2[%48, %c0_35] : memref<512x64xf32, #tpu.memory_space<vmem>>, vector<1x64xf32>
      %50 = arith.addf %44, %49 : vector<1x64xf32>
      %c0_36 = arith.constant 0 : index
      %c2 = arith.constant 2 : index
      %51 = memref.load %arg1[%c0_36, %c2] : memref<8x4xi32, #tpu.memory_space<smem>>
      %c0_i32_37 = arith.constant 0 : i32
      %c511_i32_38 = arith.constant 511 : i32
      %52 = arith.maxsi %c0_i32_37, %51 : i32
      %53 = arith.minsi %c511_i32_38, %52 : i32
      %54 = arith.index_cast %53 : i32 to index
      %c0_39 = arith.constant 0 : index
      %55 = vector.load %arg2[%54, %c0_39] : memref<512x64xf32, #tpu.memory_space<vmem>>, vector<1x64xf32>
      %56 = arith.addf %50, %55 : vector<1x64xf32>
      %c0_40 = arith.constant 0 : index
      %c3 = arith.constant 3 : index
      %57 = memref.load %arg1[%c0_40, %c3] : memref<8x4xi32, #tpu.memory_space<smem>>
      %c0_i32_41 = arith.constant 0 : i32
      %c511_i32_42 = arith.constant 511 : i32
      %58 = arith.maxsi %c0_i32_41, %57 : i32
      %59 = arith.minsi %c511_i32_42, %58 : i32
      %60 = arith.index_cast %59 : i32 to index
      %c0_43 = arith.constant 0 : index
      %61 = vector.load %arg2[%60, %c0_43] : memref<512x64xf32, #tpu.memory_space<vmem>>, vector<1x64xf32>
      %62 = arith.addf %56, %61 : vector<1x64xf32>
      %c0_44 = arith.constant 0 : index
      %c0_45 = arith.constant 0 : index
      %63 = vector.load %arg6[%c0_44, %c0_45] : memref<8x64xf32, #tpu.memory_space<vmem>>, vector<1x64xf32>
      tpu.vector_store %arg6[%c0_44, %c0_45], %62 {strides = array<i32>} : memref<8x64xf32, #tpu.memory_space<vmem>>, vector<1x64xf32>,
      %cst_46 = arith.constant 0.000000e+00 : f32
      %64 = vector.broadcast %cst_46 : f32 to vector<1x64xf32>
      %c1_47 = arith.constant 1 : index
      %c0_48 = arith.constant 0 : index
      %65 = memref.load %arg1[%c1_47, %c0_48] : memref<8x4xi32, #tpu.memory_space<smem>>
      %c0_i32_49 = arith.constant 0 : i32
      %c511_i32_50 = arith.constant 511 : i32
      %66 = arith.maxsi %c0_i32_49, %65 : i32
      %67 = arith.minsi %c511_i32_50, %66 : i32
      %68 = arith.index_cast %67 : i32 to index
      %c0_51 = arith.constant 0 : index
      %69 = vector.load %arg2[%68, %c0_51] : memref<512x64xf32, #tpu.memory_space<vmem>>, vector<1x64xf32>
      %70 = arith.addf %64, %69 : vector<1x64xf32>
      %c1_52 = arith.constant 1 : index
      %c1_53 = arith.constant 1 : index
      %71 = memref.load %arg1[%c1_52, %c1_53] : memref<8x4xi32, #tpu.memory_space<smem>>
      %c0_i32_54 = arith.constant 0 : i32
      %c511_i32_55 = arith.constant 511 : i32
      %72 = arith.maxsi %c0_i32_54, %71 : i32
      %73 = arith.minsi %c511_i32_55, %72 : i32
      %74 = arith.index_cast %73 : i32 to index
      %c0_56 = arith.constant 0 : index
      %75 = vector.load %arg2[%74, %c0_56] : memref<512x64xf32, #tpu.memory_space<vmem>>, vector<1x64xf32>
      %76 = arith.addf %70, %75 : vector<1x64xf32>
      %c1_57 = arith.constant 1 : index
      %c2_58 = arith.constant 2 : index
      %77 = memref.load %arg1[%c1_57, %c2_58] : memref<8x4xi32, #tpu.memory_space<smem>>
      %c0_i32_59 = arith.constant 0 : i32
      %c511_i32_60 = arith.constant 511 : i32
      %78 = arith.maxsi %c0_i32_59, %77 : i32
      %79 = arith.minsi %c511_i32_60, %78 : i32
      %80 = arith.index_cast %79 : i32 to index
      %c0_61 = arith.constant 0 : index
      %81 = vector.load %arg2[%80, %c0_61] : memref<512x64xf32, #tpu.memory_space<vmem>>, vector<1x64xf32>
      %82 = arith.addf %76, %81 : vector<1x64xf32>
      %c1_62 = arith.constant 1 : index
      %c3_63 = arith.constant 3 : index
      %83 = memref.load %arg1[%c1_62, %c3_63] : memref<8x4xi32, #tpu.memory_space<smem>>
      %c0_i32_64 = arith.constant 0 : i32
      %c511_i32_65 = arith.constant 511 : i32
      %84 = arith.maxsi %c0_i32_64, %83 : i32
      %85 = arith.minsi %c511_i32_65, %84 : i32
      %86 = arith.index_cast %85 : i32 to index
      %c0_66 = arith.constant 0 : index
      %87 = vector.load %arg2[%86, %c0_66] : memref<512x64xf32, #tpu.memory_space<vmem>>, vector<1x64xf32>
      %88 = arith.addf %82, %87 : vector<1x64xf32>
      %c1_67 = arith.constant 1 : index
      %c0_68 = arith.constant 0 : index
      %89 = vector.load %arg6[%c1_67, %c0_68] : memref<8x64xf32, #tpu.memory_space<vmem>>, vector<1x64xf32>
      tpu.vector_store %arg6[%c1_67, %c0_68], %88 {strides = array<i32>} : memref<8x64xf32, #tpu.memory_space<vmem>>, vector<1x64xf32>,
      %cst_69 = arith.constant 0.000000e+00 : f32
      %90 = vector.broadcast %cst_69 : f32 to vector<1x64xf32>
      %c2_70 = arith.constant 2 : index
      %c0_71 = arith.constant 0 : index
      %91 = memref.load %arg1[%c2_70, %c0_71] : memref<8x4xi32, #tpu.memory_space<smem>>
      %c0_i32_72 = arith.constant 0 : i32
      %c511_i32_73 = arith.constant 511 : i32
      %92 = arith.maxsi %c0_i32_72, %91 : i32
      %93 = arith.minsi %c511_i32_73, %92 : i32
      %94 = arith.index_cast %93 : i32 to index
      %c0_74 = arith.constant 0 : index
      %95 = vector.load %arg2[%94, %c0_74] : memref<512x64xf32, #tpu.memory_space<vmem>>, vector<1x64xf32>
      %96 = arith.addf %90, %95 : vector<1x64xf32>
      %c2_75 = arith.constant 2 : index
      %c1_76 = arith.constant 1 : index
      %97 = memref.load %arg1[%c2_75, %c1_76] : memref<8x4xi32, #tpu.memory_space<smem>>
      %c0_i32_77 = arith.constant 0 : i32
      %c511_i32_78 = arith.constant 511 : i32
      %98 = arith.maxsi %c0_i32_77, %97 : i32
      %99 = arith.minsi %c511_i32_78, %98 : i32
      %100 = arith.index_cast %99 : i32 to index
      %c0_79 = arith.constant 0 : index
      %101 = vector.load %arg2[%100, %c0_79] : memref<512x64xf32, #tpu.memory_space<vmem>>, vector<1x64xf32>
      %102 = arith.addf %96, %101 : vector<1x64xf32>
      %c2_80 = arith.constant 2 : index
      %c2_81 = arith.constant 2 : index
      %103 = memref.load %arg1[%c2_80, %c2_81] : memref<8x4xi32, #tpu.memory_space<smem>>
      %c0_i32_82 = arith.constant 0 : i32
      %c511_i32_83 = arith.constant 511 : i32
      %104 = arith.maxsi %c0_i32_82, %103 : i32
      %105 = arith.minsi %c511_i32_83, %104 : i32
      %106 = arith.index_cast %105 : i32 to index
      %c0_84 = arith.constant 0 : index
      %107 = vector.load %arg2[%106, %c0_84] : memref<512x64xf32, #tpu.memory_space<vmem>>, vector<1x64xf32>
      %108 = arith.addf %102, %107 : vector<1x64xf32>
      %c2_85 = arith.constant 2 : index
      %c3_86 = arith.constant 3 : index
      %109 = memref.load %arg1[%c2_85, %c3_86] : memref<8x4xi32, #tpu.memory_space<smem>>
      %c0_i32_87 = arith.constant 0 : i32
      %c511_i32_88 = arith.constant 511 : i32
      %110 = arith.maxsi %c0_i32_87, %109 : i32
      %111 = arith.minsi %c511_i32_88, %110 : i32
      %112 = arith.index_cast %111 : i32 to index
      %c0_89 = arith.constant 0 : index
      %113 = vector.load %arg2[%112, %c0_89] : memref<512x64xf32, #tpu.memory_space<vmem>>, vector<1x64xf32>
      %114 = arith.addf %108, %113 : vector<1x64xf32>
      %c2_90 = arith.constant 2 : index
      %c0_91 = arith.constant 0 : index
      %115 = vector.load %arg6[%c2_90, %c0_91] : memref<8x64xf32, #tpu.memory_space<vmem>>, vector<1x64xf32>
      tpu.vector_store %arg6[%c2_90, %c0_91], %114 {strides = array<i32>} : memref<8x64xf32, #tpu.memory_space<vmem>>, vector<1x64xf32>,
      %cst_92 = arith.constant 0.000000e+00 : f32
      %116 = vector.broadcast %cst_92 : f32 to vector<1x64xf32>
      %c3_93 = arith.constant 3 : index
      %c0_94 = arith.constant 0 : index
      %117 = memref.load %arg1[%c3_93, %c0_94] : memref<8x4xi32, #tpu.memory_space<smem>>
      %c0_i32_95 = arith.constant 0 : i32
      %c511_i32_96 = arith.constant 511 : i32
      %118 = arith.maxsi %c0_i32_95, %117 : i32
      %119 = arith.minsi %c511_i32_96, %118 : i32
      %120 = arith.index_cast %119 : i32 to index
      %c0_97 = arith.constant 0 : index
      %121 = vector.load %arg2[%120, %c0_97] : memref<512x64xf32, #tpu.memory_space<vmem>>, vector<1x64xf32>
      %122 = arith.addf %116, %121 : vector<1x64xf32>
      %c3_98 = arith.constant 3 : index
      %c1_99 = arith.constant 1 : index
      %123 = memref.load %arg1[%c3_98, %c1_99] : memref<8x4xi32, #tpu.memory_space<smem>>
      %c0_i32_100 = arith.constant 0 : i32
      %c511_i32_101 = arith.constant 511 : i32
      %124 = arith.maxsi %c0_i32_100, %123 : i32
      %125 = arith.minsi %c511_i32_101, %124 : i32
      %126 = arith.index_cast %125 : i32 to index
      %c0_102 = arith.constant 0 : index
      %127 = vector.load %arg2[%126, %c0_102] : memref<512x64xf32, #tpu.memory_space<vmem>>, vector<1x64xf32>
      %128 = arith.addf %122, %127 : vector<1x64xf32>
      %c3_103 = arith.constant 3 : index
      %c2_104 = arith.constant 2 : index
      %129 = memref.load %arg1[%c3_103, %c2_104] : memref<8x4xi32, #tpu.memory_space<smem>>
      %c0_i32_105 = arith.constant 0 : i32
      %c511_i32_106 = arith.constant 511 : i32
      %130 = arith.maxsi %c0_i32_105, %129 : i32
      %131 = arith.minsi %c511_i32_106, %130 : i32
      %132 = arith.index_cast %131 : i32 to index
      %c0_107 = arith.constant 0 : index
      %133 = vector.load %arg2[%132, %c0_107] : memref<512x64xf32, #tpu.memory_space<vmem>>, vector<1x64xf32>
      %134 = arith.addf %128, %133 : vector<1x64xf32>
      %c3_108 = arith.constant 3 : index
      %c3_109 = arith.constant 3 : index
      %135 = memref.load %arg1[%c3_108, %c3_109] : memref<8x4xi32, #tpu.memory_space<smem>>
      %c0_i32_110 = arith.constant 0 : i32
      %c511_i32_111 = arith.constant 511 : i32
      %136 = arith.maxsi %c0_i32_110, %135 : i32
      %137 = arith.minsi %c511_i32_111, %136 : i32
      %138 = arith.index_cast %137 : i32 to index
      %c0_112 = arith.constant 0 : index
      %139 = vector.load %arg2[%138, %c0_112] : memref<512x64xf32, #tpu.memory_space<vmem>>, vector<1x64xf32>
      %140 = arith.addf %134, %139 : vector<1x64xf32>
      %c3_113 = arith.constant 3 : index
      %c0_114 = arith.constant 0 : index
      %141 = vector.load %arg6[%c3_113, %c0_114] : memref<8x64xf32, #tpu.memory_space<vmem>>, vector<1x64xf32>
      tpu.vector_store %arg6[%c3_113, %c0_114], %140 {strides = array<i32>} : memref<8x64xf32, #tpu.memory_space<vmem>>, vector<1x64xf32>,
      %cst_115 = arith.constant 0.000000e+00 : f32
      %142 = vector.broadcast %cst_115 : f32 to vector<1x64xf32>
      %c4 = arith.constant 4 : index
      %c0_116 = arith.constant 0 : index
      %143 = memref.load %arg1[%c4, %c0_116] : memref<8x4xi32, #tpu.memory_space<smem>>
      %c0_i32_117 = arith.constant 0 : i32
      %c511_i32_118 = arith.constant 511 : i32
      %144 = arith.maxsi %c0_i32_117, %143 : i32
      %145 = arith.minsi %c511_i32_118, %144 : i32
      %146 = arith.index_cast %145 : i32 to index
      %c0_119 = arith.constant 0 : index
      %147 = vector.load %arg2[%146, %c0_119] : memref<512x64xf32, #tpu.memory_space<vmem>>, vector<1x64xf32>
      %148 = arith.addf %142, %147 : vector<1x64xf32>
      %c4_120 = arith.constant 4 : index
      %c1_121 = arith.constant 1 : index
      %149 = memref.load %arg1[%c4_120, %c1_121] : memref<8x4xi32, #tpu.memory_space<smem>>
      %c0_i32_122 = arith.constant 0 : i32
      %c511_i32_123 = arith.constant 511 : i32
      %150 = arith.maxsi %c0_i32_122, %149 : i32
      %151 = arith.minsi %c511_i32_123, %150 : i32
      %152 = arith.index_cast %151 : i32 to index
      %c0_124 = arith.constant 0 : index
      %153 = vector.load %arg2[%152, %c0_124] : memref<512x64xf32, #tpu.memory_space<vmem>>, vector<1x64xf32>
      %154 = arith.addf %148, %153 : vector<1x64xf32>
      %c4_125 = arith.constant 4 : index
      %c2_126 = arith.constant 2 : index
      %155 = memref.load %arg1[%c4_125, %c2_126] : memref<8x4xi32, #tpu.memory_space<smem>>
      %c0_i32_127 = arith.constant 0 : i32
      %c511_i32_128 = arith.constant 511 : i32
      %156 = arith.maxsi %c0_i32_127, %155 : i32
      %157 = arith.minsi %c511_i32_128, %156 : i32
      %158 = arith.index_cast %157 : i32 to index
      %c0_129 = arith.constant 0 : index
      %159 = vector.load %arg2[%158, %c0_129] : memref<512x64xf32, #tpu.memory_space<vmem>>, vector<1x64xf32>
      %160 = arith.addf %154, %159 : vector<1x64xf32>
      %c4_130 = arith.constant 4 : index
      %c3_131 = arith.constant 3 : index
      %161 = memref.load %arg1[%c4_130, %c3_131] : memref<8x4xi32, #tpu.memory_space<smem>>
      %c0_i32_132 = arith.constant 0 : i32
      %c511_i32_133 = arith.constant 511 : i32
      %162 = arith.maxsi %c0_i32_132, %161 : i32
      %163 = arith.minsi %c511_i32_133, %162 : i32
      %164 = arith.index_cast %163 : i32 to index
      %c0_134 = arith.constant 0 : index
      %165 = vector.load %arg2[%164, %c0_134] : memref<512x64xf32, #tpu.memory_space<vmem>>, vector<1x64xf32>
      %166 = arith.addf %160, %165 : vector<1x64xf32>
      %c4_135 = arith.constant 4 : index
      %c0_136 = arith.constant 0 : index
      %167 = vector.load %arg6[%c4_135, %c0_136] : memref<8x64xf32, #tpu.memory_space<vmem>>, vector<1x64xf32>
      tpu.vector_store %arg6[%c4_135, %c0_136], %166 {strides = array<i32>} : memref<8x64xf32, #tpu.memory_space<vmem>>, vector<1x64xf32>,
      %cst_137 = arith.constant 0.000000e+00 : f32
      %168 = vector.broadcast %cst_137 : f32 to vector<1x64xf32>
      %c5 = arith.constant 5 : index
      %c0_138 = arith.constant 0 : index
      %169 = memref.load %arg1[%c5, %c0_138] : memref<8x4xi32, #tpu.memory_space<smem>>
      %c0_i32_139 = arith.constant 0 : i32
      %c511_i32_140 = arith.constant 511 : i32
      %170 = arith.maxsi %c0_i32_139, %169 : i32
      %171 = arith.minsi %c511_i32_140, %170 : i32
      %172 = arith.index_cast %171 : i32 to index
      %c0_141 = arith.constant 0 : index
      %173 = vector.load %arg2[%172, %c0_141] : memref<512x64xf32, #tpu.memory_space<vmem>>, vector<1x64xf32>
      %174 = arith.addf %168, %173 : vector<1x64xf32>
      %c5_142 = arith.constant 5 : index
      %c1_143 = arith.constant 1 : index
      %175 = memref.load %arg1[%c5_142, %c1_143] : memref<8x4xi32, #tpu.memory_space<smem>>
      %c0_i32_144 = arith.constant 0 : i32
      %c511_i32_145 = arith.constant 511 : i32
      %176 = arith.maxsi %c0_i32_144, %175 : i32
      %177 = arith.minsi %c511_i32_145, %176 : i32
      %178 = arith.index_cast %177 : i32 to index
      %c0_146 = arith.constant 0 : index
      %179 = vector.load %arg2[%178, %c0_146] : memref<512x64xf32, #tpu.memory_space<vmem>>, vector<1x64xf32>
      %180 = arith.addf %174, %179 : vector<1x64xf32>
      %c5_147 = arith.constant 5 : index
      %c2_148 = arith.constant 2 : index
      %181 = memref.load %arg1[%c5_147, %c2_148] : memref<8x4xi32, #tpu.memory_space<smem>>
      %c0_i32_149 = arith.constant 0 : i32
      %c511_i32_150 = arith.constant 511 : i32
      %182 = arith.maxsi %c0_i32_149, %181 : i32
      %183 = arith.minsi %c511_i32_150, %182 : i32
      %184 = arith.index_cast %183 : i32 to index
      %c0_151 = arith.constant 0 : index
      %185 = vector.load %arg2[%184, %c0_151] : memref<512x64xf32, #tpu.memory_space<vmem>>, vector<1x64xf32>
      %186 = arith.addf %180, %185 : vector<1x64xf32>
      %c5_152 = arith.constant 5 : index
      %c3_153 = arith.constant 3 : index
      %187 = memref.load %arg1[%c5_152, %c3_153] : memref<8x4xi32, #tpu.memory_space<smem>>
      %c0_i32_154 = arith.constant 0 : i32
      %c511_i32_155 = arith.constant 511 : i32
      %188 = arith.maxsi %c0_i32_154, %187 : i32
      %189 = arith.minsi %c511_i32_155, %188 : i32
      %190 = arith.index_cast %189 : i32 to index
      %c0_156 = arith.constant 0 : index
      %191 = vector.load %arg2[%190, %c0_156] : memref<512x64xf32, #tpu.memory_space<vmem>>, vector<1x64xf32>
      %192 = arith.addf %186, %191 : vector<1x64xf32>
      %c5_157 = arith.constant 5 : index
      %c0_158 = arith.constant 0 : index
      %193 = vector.load %arg6[%c5_157, %c0_158] : memref<8x64xf32, #tpu.memory_space<vmem>>, vector<1x64xf32>
      tpu.vector_store %arg6[%c5_157, %c0_158], %192 {strides = array<i32>} : memref<8x64xf32, #tpu.memory_space<vmem>>, vector<1x64xf32>,
      %cst_159 = arith.constant 0.000000e+00 : f32
      %194 = vector.broadcast %cst_159 : f32 to vector<1x64xf32>
      %c6 = arith.constant 6 : index
      %c0_160 = arith.constant 0 : index
      %195 = memref.load %arg1[%c6, %c0_160] : memref<8x4xi32, #tpu.memory_space<smem>>
      %c0_i32_161 = arith.constant 0 : i32
      %c511_i32_162 = arith.constant 511 : i32
      %196 = arith.maxsi %c0_i32_161, %195 : i32
      %197 = arith.minsi %c511_i32_162, %196 : i32
      %198 = arith.index_cast %197 : i32 to index
      %c0_163 = arith.constant 0 : index
      %199 = vector.load %arg2[%198, %c0_163] : memref<512x64xf32, #tpu.memory_space<vmem>>, vector<1x64xf32>
      %200 = arith.addf %194, %199 : vector<1x64xf32>
      %c6_164 = arith.constant 6 : index
      %c1_165 = arith.constant 1 : index
      %201 = memref.load %arg1[%c6_164, %c1_165] : memref<8x4xi32, #tpu.memory_space<smem>>
      %c0_i32_166 = arith.constant 0 : i32
      %c511_i32_167 = arith.constant 511 : i32
      %202 = arith.maxsi %c0_i32_166, %201 : i32
      %203 = arith.minsi %c511_i32_167, %202 : i32
      %204 = arith.index_cast %203 : i32 to index
      %c0_168 = arith.constant 0 : index
      %205 = vector.load %arg2[%204, %c0_168] : memref<512x64xf32, #tpu.memory_space<vmem>>, vector<1x64xf32>
      %206 = arith.addf %200, %205 : vector<1x64xf32>
      %c6_169 = arith.constant 6 : index
      %c2_170 = arith.constant 2 : index
      %207 = memref.load %arg1[%c6_169, %c2_170] : memref<8x4xi32, #tpu.memory_space<smem>>
      %c0_i32_171 = arith.constant 0 : i32
      %c511_i32_172 = arith.constant 511 : i32
      %208 = arith.maxsi %c0_i32_171, %207 : i32
      %209 = arith.minsi %c511_i32_172, %208 : i32
      %210 = arith.index_cast %209 : i32 to index
      %c0_173 = arith.constant 0 : index
      %211 = vector.load %arg2[%210, %c0_173] : memref<512x64xf32, #tpu.memory_space<vmem>>, vector<1x64xf32>
      %212 = arith.addf %206, %211 : vector<1x64xf32>
      %c6_174 = arith.constant 6 : index
      %c3_175 = arith.constant 3 : index
      %213 = memref.load %arg1[%c6_174, %c3_175] : memref<8x4xi32, #tpu.memory_space<smem>>
      %c0_i32_176 = arith.constant 0 : i32
      %c511_i32_177 = arith.constant 511 : i32
      %214 = arith.maxsi %c0_i32_176, %213 : i32
      %215 = arith.minsi %c511_i32_177, %214 : i32
      %216 = arith.index_cast %215 : i32 to index
      %c0_178 = arith.constant 0 : index
      %217 = vector.load %arg2[%216, %c0_178] : memref<512x64xf32, #tpu.memory_space<vmem>>, vector<1x64xf32>
      %218 = arith.addf %212, %217 : vector<1x64xf32>
      %c6_179 = arith.constant 6 : index
      %c0_180 = arith.constant 0 : index
      %219 = vector.load %arg6[%c6_179, %c0_180] : memref<8x64xf32, #tpu.memory_space<vmem>>, vector<1x64xf32>
      tpu.vector_store %arg6[%c6_179, %c0_180], %218 {strides = array<i32>} : memref<8x64xf32, #tpu.memory_space<vmem>>, vector<1x64xf32>,
      %cst_181 = arith.constant 0.000000e+00 : f32
      %220 = vector.broadcast %cst_181 : f32 to vector<1x64xf32>
      %c7 = arith.constant 7 : index
      %c0_182 = arith.constant 0 : index
      %221 = memref.load %arg1[%c7, %c0_182] : memref<8x4xi32, #tpu.memory_space<smem>>
      %c0_i32_183 = arith.constant 0 : i32
      %c511_i32_184 = arith.constant 511 : i32
      %222 = arith.maxsi %c0_i32_183, %221 : i32
      %223 = arith.minsi %c511_i32_184, %222 : i32
      %224 = arith.index_cast %223 : i32 to index
      %c0_185 = arith.constant 0 : index
      %225 = vector.load %arg2[%224, %c0_185] : memref<512x64xf32, #tpu.memory_space<vmem>>, vector<1x64xf32>
      %226 = arith.addf %220, %225 : vector<1x64xf32>
      %c7_186 = arith.constant 7 : index
      %c1_187 = arith.constant 1 : index
      %227 = memref.load %arg1[%c7_186, %c1_187] : memref<8x4xi32, #tpu.memory_space<smem>>
      %c0_i32_188 = arith.constant 0 : i32
      %c511_i32_189 = arith.constant 511 : i32
      %228 = arith.maxsi %c0_i32_188, %227 : i32
      %229 = arith.minsi %c511_i32_189, %228 : i32
      %230 = arith.index_cast %229 : i32 to index
      %c0_190 = arith.constant 0 : index
      %231 = vector.load %arg2[%230, %c0_190] : memref<512x64xf32, #tpu.memory_space<vmem>>, vector<1x64xf32>
      %232 = arith.addf %226, %231 : vector<1x64xf32>
      %c7_191 = arith.constant 7 : index
      %c2_192 = arith.constant 2 : index
      %233 = memref.load %arg1[%c7_191, %c2_192] : memref<8x4xi32, #tpu.memory_space<smem>>
      %c0_i32_193 = arith.constant 0 : i32
      %c511_i32_194 = arith.constant 511 : i32
      %234 = arith.maxsi %c0_i32_193, %233 : i32
      %235 = arith.minsi %c511_i32_194, %234 : i32
      %236 = arith.index_cast %235 : i32 to index
      %c0_195 = arith.constant 0 : index
      %237 = vector.load %arg2[%236, %c0_195] : memref<512x64xf32, #tpu.memory_space<vmem>>, vector<1x64xf32>
      %238 = arith.addf %232, %237 : vector<1x64xf32>
      %c7_196 = arith.constant 7 : index
      %c3_197 = arith.constant 3 : index
      %239 = memref.load %arg1[%c7_196, %c3_197] : memref<8x4xi32, #tpu.memory_space<smem>>
      %c0_i32_198 = arith.constant 0 : i32
      %c511_i32_199 = arith.constant 511 : i32
      %240 = arith.maxsi %c0_i32_198, %239 : i32
      %241 = arith.minsi %c511_i32_199, %240 : i32
      %242 = arith.index_cast %241 : i32 to index
      %c0_200 = arith.constant 0 : index
      %243 = vector.load %arg2[%242, %c0_200] : memref<512x64xf32, #tpu.memory_space<vmem>>, vector<1x64xf32>
      %244 = arith.addf %238, %243 : vector<1x64xf32>
      %c7_201 = arith.constant 7 : index
      %c0_202 = arith.constant 0 : index
      %245 = vector.load %arg6[%c7_201, %c0_202] : memref<8x64xf32, #tpu.memory_space<vmem>>, vector<1x64xf32>
      tpu.vector_store %arg6[%c7_201, %c0_202], %244 {strides = array<i32>} : memref<8x64xf32, #tpu.memory_space<vmem>>, vector<1x64xf32>,
    } else {
    }
    %c0 = arith.constant 0 : index
    %c0_1 = arith.constant 0 : index
    %3 = vector.load %arg6[%c0, %c0_1] : memref<8x64xf32, #tpu.memory_space<vmem>>, vector<8x64xf32>
    %4 = arith.truncf %3 : vector<8x64xf32> to vector<8x64xbf16>
    %c0_2 = arith.constant 0 : index
    %c0_3 = arith.constant 0 : index
    %5 = vector.load %arg3[%c0_2, %c0_3] : memref<64x256xbf16, #tpu.memory_space<vmem>>, vector<64x256xbf16>
    %cst = arith.constant dense<0.000000e+00> : vector<8x256xf32>
    %6 = tpu.matmul %4, %5, %cst {dimension_numbers = #tpu.dot_dimension_numbers<[1], [0], [0], [1], [0, 0, 1, 1], [], []>} : vector<8x64xbf16>, vector<64x256xbf16>, vector<8x256xf32> -> vector<8x256xf32>
    %c0_4 = arith.constant 0 : index
    %c0_5 = arith.constant 0 : index
    %7 = vector.load %arg4[%c0_4, %c0_5] : memref<1x256xf32, #tpu.memory_space<vmem>>, vector<1x256xf32>
    %8 = vector.broadcast %7 : vector<1x256xf32> to vector<8x256xf32>
    %9 = arith.addf %6, %8 : vector<8x256xf32>
    %10 = arith.index_cast %arg0 : i32 to index
    %c0_6 = arith.constant 0 : index
    %c0_7 = arith.constant 0 : index
    %11 = vector.load %arg9[%10, %c0_6, %c0_7] : memref<2x8x256xf32, #tpu.memory_space<vmem>>, vector<1x8x256xf32>
    %12 = vector.shape_cast %11 : vector<1x8x256xf32> to vector<8x256xf32>
    %13 = vector.shape_cast %9 : vector<8x256xf32> to vector<1x8x256xf32>
    tpu.vector_store %arg9[%10, %c0_6, %c0_7], %13 {strides = array<i32>} : memref<2x8x256xf32, #tpu.memory_space<vmem>>, vector<1x8x256xf32>,
    %cst_8 = arith.constant dense<0xFF800000> : vector<8xf32>
    %14 = vector.multi_reduction <maximumf>, %9, %cst_8 [1] : vector<8x256xf32> to vector<8xf32>
    %15 = vector.shape_cast %14 : vector<8xf32> to vector<8x1xf32>
    %c0_9 = arith.constant 0 : index
    %c0_10 = arith.constant 0 : index
    %16 = vector.load %arg7[%c0_9, %c0_10] : memref<8x1xf32, #tpu.memory_space<vmem>>, vector<8x1xf32>
    %17 = arith.maximumf %16, %15 : vector<8x1xf32>
    %c0_11 = arith.constant 0 : index
    %c0_12 = arith.constant 0 : index
    %18 = vector.load %arg8[%c0_11, %c0_12] : memref<8x1xf32, #tpu.memory_space<vmem>>, vector<8x1xf32>
    %c0_13 = arith.constant 0 : index
    %c0_14 = arith.constant 0 : index
    %19 = vector.load %arg7[%c0_13, %c0_14] : memref<8x1xf32, #tpu.memory_space<vmem>>, vector<8x1xf32>
    %20 = arith.subf %19, %17 : vector<8x1xf32>
    %21 = math.exp %20 : vector<8x1xf32>
    %22 = arith.mulf %18, %21 : vector<8x1xf32>
    %23 = vector.broadcast %17 : vector<8x1xf32> to vector<8x256xf32>
    %24 = arith.subf %9, %23 : vector<8x256xf32>
    %25 = math.exp %24 : vector<8x256xf32>
    %cst_15 = arith.constant dense<0.000000e+00> : vector<8xf32>
    %26 = vector.multi_reduction <add>, %25, %cst_15 [1] : vector<8x256xf32> to vector<8xf32>
    %27 = vector.shape_cast %26 : vector<8xf32> to vector<8x1xf32>
    %28 = arith.addf %22, %27 : vector<8x1xf32>
    %c0_16 = arith.constant 0 : index
    %c0_17 = arith.constant 0 : index
    %29 = vector.load %arg8[%c0_16, %c0_17] : memref<8x1xf32, #tpu.memory_space<vmem>>, vector<8x1xf32>
    tpu.vector_store %arg8[%c0_16, %c0_17], %28 {strides = array<i32>} : memref<8x1xf32, #tpu.memory_space<vmem>>, vector<8x1xf32>,
    %c0_18 = arith.constant 0 : index
    %c0_19 = arith.constant 0 : index
    %30 = vector.load %arg7[%c0_18, %c0_19] : memref<8x1xf32, #tpu.memory_space<vmem>>, vector<8x1xf32>
    tpu.vector_store %arg7[%c0_18, %c0_19], %17 {strides = array<i32>} : memref<8x1xf32, #tpu.memory_space<vmem>>, vector<8x1xf32>,
    %c1_i32 = arith.constant 1 : i32
    %31 = arith.cmpi eq, %arg0, %c1_i32 : i32
    %32 = arith.extui %31 : i1 to i32
    %c0_i32_20 = arith.constant 0 : i32
    %33 = arith.cmpi ne, %32, %c0_i32_20 : i32
    scf.if %33 {
      %c0_21 = arith.constant 0 : index
      %c0_22 = arith.constant 0 : index
      %34 = vector.load %arg7[%c0_21, %c0_22] : memref<8x1xf32, #tpu.memory_space<vmem>>, vector<8x1xf32>
      %c0_23 = arith.constant 0 : index
      %c0_24 = arith.constant 0 : index
      %35 = vector.load %arg8[%c0_23, %c0_24] : memref<8x1xf32, #tpu.memory_space<vmem>>, vector<8x1xf32>
      %36 = math.log %35 : vector<8x1xf32>
      %37 = arith.addf %34, %36 : vector<8x1xf32>
      %c0_25 = arith.constant 0 : index
      %c0_26 = arith.constant 0 : index
      %c0_27 = arith.constant 0 : index
      %38 = vector.load %arg9[%c0_25, %c0_26, %c0_27] : memref<2x8x256xf32, #tpu.memory_space<vmem>>, vector<1x8x256xf32>
      %39 = vector.shape_cast %38 : vector<1x8x256xf32> to vector<8x256xf32>
      %40 = vector.broadcast %37 : vector<8x1xf32> to vector<8x256xf32>
      %41 = arith.subf %39, %40 : vector<8x256xf32>
      %c0_28 = arith.constant 0 : index
      %c0_29 = arith.constant 0 : index
      %42 = vector.load %arg5[%c0_28, %c0_29] : memref<8x512xf32, #tpu.memory_space<vmem>>, vector<8x256xf32>
      tpu.vector_store %arg5[%c0_28, %c0_29], %41 {strides = array<i32>} : memref<8x512xf32, #tpu.memory_space<vmem>>, vector<8x256xf32>,
      %c1 = arith.constant 1 : index
      %c0_30 = arith.constant 0 : index
      %c0_31 = arith.constant 0 : index
      %43 = vector.load %arg9[%c1, %c0_30, %c0_31] : memref<2x8x256xf32, #tpu.memory_space<vmem>>, vector<1x8x256xf32>
      %44 = vector.shape_cast %43 : vector<1x8x256xf32> to vector<8x256xf32>
      %45 = vector.broadcast %37 : vector<8x1xf32> to vector<8x256xf32>
      %46 = arith.subf %44, %45 : vector<8x256xf32>
      %c0_32 = arith.constant 0 : index
      %c256 = arith.constant 256 : index
      %47 = vector.load %arg5[%c0_32, %c256] : memref<8x512xf32, #tpu.memory_space<vmem>>, vector<8x256xf32>
      tpu.vector_store %arg5[%c0_32, %c256], %46 {strides = array<i32>} : memref<8x512xf32, #tpu.memory_space<vmem>>, vector<8x256xf32>,
    } else {
    }
    return
  }
  func.func @transform_0(%arg0: i32, %arg1: memref<8x4xi32, #tpu.memory_space<smem>>) -> (i32, i32) {
    %c0_i32 = arith.constant 0 : i32
    %c0_i32_0 = arith.constant 0 : i32
    %c0_i32_1 = arith.constant 0 : i32
    return %c0_i32, %c0_i32_0 : i32, i32
  }
  func.func @transform_1(%arg0: i32, %arg1: memref<8x4xi32, #tpu.memory_space<smem>>) -> (i32, i32) {
    %c0_i32 = arith.constant 0 : i32
    %c0_i32_0 = arith.constant 0 : i32
    return %c0_i32, %arg0 : i32, i32
  }
  func.func @transform_2(%arg0: i32, %arg1: memref<8x4xi32, #tpu.memory_space<smem>>) -> (i32, i32) {
    %c0_i32 = arith.constant 0 : i32
    %c0_i32_0 = arith.constant 0 : i32
    return %c0_i32, %arg0 : i32, i32
  }
  func.func @transform_3(%arg0: i32, %arg1: memref<8x4xi32, #tpu.memory_space<smem>>) -> (i32, i32) {
    %c0_i32 = arith.constant 0 : i32
    %c0_i32_0 = arith.constant 0 : i32
    %c0_i32_1 = arith.constant 0 : i32
    return %c0_i32, %c0_i32_0 : i32, i32
  }
}

</mosaic_0001>

<llo_original>
// kernel: tpu_custom_call.1
$region0: #{tpu_custom_call.1}
  #allocation0 [shape = 'u32[]', space=smem, size = 0x4, offset = 0x4, fixed_abs, tag = 'smem constant byte address 0x4 - core index']
  #allocation1 [shape = 'u32[144,128]{1,0:T(1,128)}', space=vmem, size = 0x12000, scoped, tag = 'internal scratch']
  #allocation2 [shape = 'f32[8,64]{1,0:T(8,128)}', space=vmem, size = 0x1000, scoped, tag = 'scratch operand']
  #allocation3 [shape = 'f32[8,1]{1,0:T(8,128)}', space=vmem, size = 0x1000, scoped, tag = 'scratch operand']
  #allocation4 [shape = 'f32[8,1]{1,0:T(8,128)}', space=vmem, size = 0x1000, scoped, tag = 'scratch operand']
  #allocation5 [shape = 'f32[2,8,256]{2,1,0:T(8,128)}', space=vmem, size = 0x4000, scoped, tag = 'scratch operand']
  #allocation6 [shape = 's32[1]{0}', space=sflag, size = 0x4, scoped, tag = 'scoped memory for tpu_custom_call.1']
  #allocation7 [shape = 'u8[4096]{0}', space=smem, size = 0x1000, scoped, tag = 'prefetched SMEM operand 0']
  %s0 = inlined_call_operand.vmem [shape: s32[8,4], index: 0, kind: input, shape index: {}]
  %s1 = inlined_call_operand.vmem [shape: f32[512,64], index: 1, kind: input, shape index: {}]
  %s2 = inlined_call_operand.vmem [shape: bf16[64,512], index: 2, kind: input, shape index: {}]
  %s3 = inlined_call_operand.vmem [shape: f32[1,512], index: 3, kind: input, shape index: {}]
  %s4 = inlined_call_operand.hbm [shape: f32[8,512], index: 4, kind: output, shape index: {}]
  %s5 = sld [smem:[#allocation0]]
  $region91: #{tpu_custom_call.1} parent=0
    _
  %s7 = ssub.s32 1, %s5
  %s8 = scalar_select 0, %s7, %s5
  %s9 = sshll.u32 %s0, 4
  %s10 = int_to_ptr.vmem [resolvable:$true] %s9
  %12 = dma.vmem_to_smem %s10, 128, [#allocation7], [#allocation6]
  %13 = dma.done [#allocation6], 128
  %14 = sfence
  $region1: #{tpu_custom_call.1} parent=0
    #allocation8 [shape = 'u8[65536]{0}', space=vmem, size = 0x10000, scoped, tag = 'input window, operand 2']
    #allocation9 [shape = 'u8[16384]{0}', space=vmem, size = 0x4000, scoped, tag = 'output window, operand 0, single buffered']
    #allocation10 [shape = 's32[2]{0}', space=sflag, size = 0x8, scoped, tag = 'scoped memory for tpu_custom_call.1']
    %15 = vsyncpa [#allocation10], 0
    loop: start=0, step=1, limit=4
    $region2: #{tpu_custom_call.1} parent=1 // loop_pre_header
      _
    $region3: #{tpu_custom_call.1} parent=1 // loop_header
      %s17 = sphi 0, %s21
      %p18 = scmp.ge.s32.totalorder %s17, 4
      %s25 = sphi 0, %s25
      %s27 = sphi 0, %s25
      %s28 = sphi 0, %s27
      %s42 = sphi 0, %s28
      %s48 = sphi 0, %s50
      %s51 = sphi 0, %s48
      %s52 = sphi 0, %s51
      %s68 = sphi 0, %s52
      %s74 = sphi 0, %s76
      %s77 = sphi 0, %s74
      %s78 = sphi 0, %s77
      %s94 = sphi 0, %s78
      %s98 = sphi 0, %s98
      %s100 = sphi 0, %s98
      %s101 = sphi 0, %s100
      %s115 = sphi 0, %s101
    $region4: #{tpu_custom_call.1} parent=1 // loop_header_branch
      %20 = sbr.rel (%p18) target = $region8
    $region5: #{tpu_custom_call.1} parent=1 // loop_body
      %s22 = ssub.s32 %s17, 1
      %s23 = ssub.s32 %s17, 2
      %s24 = sadd.s32 %s17, 1
      %s26 = sadd.s32 %s25, 1
      %p29 = scmp.eq.s32.totalorder %s17, 1
      %p30 = scmp.ne.s32.totalorder %s25, %s27
      %p31 = scmp.eq.s32.totalorder %s17, 0
      %p32 = por %p30, %p31
      %p33 = scmp.ne.s32.totalorder %s25, %s27
      %p34 = scmp.eq.s32.totalorder %s22, 1
      %p35 = por %p33, %p34
      %p36 = scmp.ne.s32.totalorder %s27, %s28
      %p37 = scmp.eq.s32.totalorder %s22, 0
      %p38 = por %p36, %p37
      %p39 = scmp.ne.s32.totalorder %s27, %s28
      %p40 = scmp.eq.s32.totalorder %s23, 1
      %p41 = por %p39, %p40
      %p43 = scmp.ne.s32.totalorder %s28, %s42
      %p44 = scmp.eq.s32.totalorder %s23, 0
      %p45 = por %p43, %p44
      %s46 = ssub.s32 %s17, %s24
      %p47 = scmp.eq.s32.totalorder %s46, 0
      %s49 = sadd.s32 %s48, 1
      %s50 = scalar_select %p47, %s48, %s49
      %p53 = pneg %p47
      %p54 = scmp.eq.s32.totalorder %s17, 1
      %p55 = por %p53, %p54
      %p56 = scmp.ne.s32.totalorder %s48, %s51
      %p57 = scmp.eq.s32.totalorder %s17, 0
      %p58 = por %p56, %p57
      %p59 = scmp.ne.s32.totalorder %s48, %s51
      %p60 = scmp.eq.s32.totalorder %s22, 1
      %p61 = por %p59, %p60
      %p62 = scmp.ne.s32.totalorder %s51, %s52
      %p63 = scmp.eq.s32.totalorder %s22, 0
      %p64 = por %p62, %p63
      %p65 = scmp.ne.s32.totalorder %s51, %s52
      %p66 = scmp.eq.s32.totalorder %s23, 1
      %p67 = por %p65, %p66
      %p69 = scmp.ne.s32.totalorder %s52, %s68
      %p70 = scmp.eq.s32.totalorder %s23, 0
      %p71 = por %p69, %p70
      %s72 = ssub.s32 %s17, %s24
      %p73 = scmp.eq.s32.totalorder %s72, 0
      %s75 = sadd.s32 %s74, 1
      %s76 = scalar_select %p73, %s74, %s75
      %p79 = pneg %p73
      %p80 = scmp.eq.s32.totalorder %s17, 1
      %p81 = por %p79, %p80
      %p82 = scmp.ne.s32.totalorder %s74, %s77
      %p83 = scmp.eq.s32.totalorder %s17, 0
      %p84 = por %p82, %p83
      %p85 = scmp.ne.s32.totalorder %s74, %s77
      %p86 = scmp.eq.s32.totalorder %s22, 1
      %p87 = por %p85, %p86
      %p88 = scmp.ne.s32.totalorder %s77, %s78
      %p89 = scmp.eq.s32.totalorder %s22, 0
      %p90 = por %p88, %p89
      %p91 = scmp.ne.s32.totalorder %s77, %s78
      %p92 = scmp.eq.s32.totalorder %s23, 1
      %p93 = por %p91, %p92
      %p95 = scmp.ne.s32.totalorder %s78, %s94
      %p96 = scmp.eq.s32.totalorder %s23, 0
      %p97 = por %p95, %p96
      %s99 = sadd.s32 %s98, 1
      %p102 = scmp.eq.s32.totalorder %s17, 1
      %p103 = scmp.ne.s32.totalorder %s98, %s100
      %p104 = scmp.eq.s32.totalorder %s17, 0
      %p105 = por %p103, %p104
      %p106 = scmp.ne.s32.totalorder %s98, %s100
      %p107 = scmp.eq.s32.totalorder %s22, 1
      %p108 = por %p106, %p107
      %p109 = scmp.ne.s32.totalorder %s100, %s101
      %p110 = scmp.eq.s32.totalorder %s22, 0
      %p111 = por %p109, %p110
      %p112 = scmp.ne.s32.totalorder %s100, %s101
      %p113 = scmp.eq.s32.totalorder %s23, 1
      %p114 = por %p112, %p113
      %p116 = scmp.ne.s32.totalorder %s101, %s115
      %p117 = scmp.eq.s32.totalorder %s23, 0
      %p118 = por %p116, %p117
      %p119 = scmp.le.s32.totalorder 1, %s17
      %p120 = scmp.lt.s32.totalorder %s17, 3
      %p121 = pnand %p119, %p120
      %p122 = pneg %p121
      // Predicated region
      $region9: #{tpu_custom_call.1} parent=5 // pred_check
        _
      $region10: #{tpu_custom_call.1} parent=5 // pred_check_branch
        %124 = sbr.rel (%p121) target = $region12
      $region11: #{tpu_custom_call.1} parent=5 // pred_region
        %s125 = ssub.s32 %s17, 1
        // Predicated region
        $region13: #{tpu_custom_call.1} parent=11 // pred_check
          %p126 = pneg %p38
        $region14: #{tpu_custom_call.1} parent=11 // pred_check_branch
          %128 = sbr.rel (%p126) target = $region16
        $region15: #{tpu_custom_call.1} parent=11 // pred_region
          _
        $region16: #{tpu_custom_call.1} parent=11 // pred_fallthru
          _
      $region12: #{tpu_custom_call.1} parent=5 // pred_fallthru
        _
      %p129 = scmp.lt.s32.totalorder %s17, 2
      // Predicated region
      $region17: #{tpu_custom_call.1} parent=5 // pred_check
        %p130 = pneg %p129
      $region18: #{tpu_custom_call.1} parent=5 // pred_check_branch
        %132 = sbr.rel (%p130) target = $region20
      $region19: #{tpu_custom_call.1} parent=5 // pred_region
        // Predicated region
        $region21: #{tpu_custom_call.1} parent=19 // pred_check
          %p133 = pneg %p58
        $region22: #{tpu_custom_call.1} parent=19 // pred_check_branch
          %135 = sbr.rel (%p133) target = $region24
        $region23: #{tpu_custom_call.1} parent=19 // pred_region
          %s136 = sand.u32 %s48, 1
          %s137 = sand.u32 %s48, 1
          %s138 = smul.addr %s137, 64
          %s139 = scalar_lea.vmem [#allocation8], %s138
          %s140 = smul.u32 2, %s17
          %s141 = smul.addr %s140, 4
          %s142 = scalar_lea.vmem %s2, %s141
          // Predicated region
          $region25: #{tpu_custom_call.1} parent=23 // pred_check
            _
          $region26: #{tpu_custom_call.1} parent=23 // pred_check_branch
            %144 = sbr.rel (0) target = $region28
          $region27: #{tpu_custom_call.1} parent=23 // pred_region
            // Predicated region
            $region29: #{tpu_custom_call.1} parent=27 // pred_check
              _
            $region30: #{tpu_custom_call.1} parent=27 // pred_check_branch
              %146 = sbr.rel (0) target = $region32
            $region31: #{tpu_custom_call.1} parent=27 // pred_region
              // Predicated region
              $region44: #{tpu_custom_call.1} parent=31 // pred_check
                _
              $region45: #{tpu_custom_call.1} parent=31 // pred_check_branch
                %176 = sbr.rel (0) target = $region47
              $region46: #{tpu_custom_call.1} parent=31 // pred_region
                loop: start=0, step=1, limit=1
                $region48: #{tpu_custom_call.1} parent=46 // loop_pre_header
                  _
                $region49: #{tpu_custom_call.1} parent=46 // loop_header
                  %s178 = sphi 0, %s182
                  %p179 = scmp.ge.s32.totalorder %s178, 1
                  %s183 = sphi %s142, %s142
                  %s184 = sphi %s139, %s139
                $region50: #{tpu_custom_call.1} parent=46 // loop_header_branch
                  %181 = sbr.rel (%p179) target = $region54
                $region51: #{tpu_custom_call.1} parent=46 // loop_body
                  %v185 = vld [vmem:[%s183] sm:$0xff]
                  %186 = vst [vmem:[%s184] sm:$0xff] %v185
                  %v187 = vld [vmem:[%s183 + $0x10] sm:$0xff]
                  %188 = vst [vmem:[%s184 + $0x8] sm:$0xff] %v187
                  %v189 = vld [vmem:[%s183 + $0x20] sm:$0xff]
                  %190 = vst [vmem:[%s184 + $0x10] sm:$0xff] %v189
                  %v191 = vld [vmem:[%s183 + $0x30] sm:$0xff]
                  %192 = vst [vmem:[%s184 + $0x18] sm:$0xff] %v191
                  %v193 = vld [vmem:[%s183 + $0x40] sm:$0xff]
                  %194 = vst [vmem:[%s184 + $0x20] sm:$0xff] %v193
                  %v195 = vld [vmem:[%s183 + $0x50] sm:$0xff]
                  %196 = vst [vmem:[%s184 + $0x28] sm:$0xff] %v195
                  %v197 = vld [vmem:[%s183 + $0x60] sm:$0xff]
                  %198 = vst [vmem:[%s184 + $0x30] sm:$0xff] %v197
                  %v199 = vld [vmem:[%s183 + $0x70] sm:$0xff]
                  %200 = vst [vmem:[%s184 + $0x38] sm:$0xff] %v199
                $region52: #{tpu_custom_call.1} parent=46 // loop_footer
                  %s182 = sadd.s32 1, %s178
                $region53: #{tpu_custom_call.1} parent=46 // loop_footer_branch
                  %177 = sbr.rel target = $region49
                $region54: #{tpu_custom_call.1} parent=46 // loop_exit
                  _
              $region47: #{tpu_custom_call.1} parent=31 // pred_fallthru
                _
              // Predicated region
              $region55: #{tpu_custom_call.1} parent=31 // pred_check
                _
              $region56: #{tpu_custom_call.1} parent=31 // pred_check_branch
                %202 = sbr.rel target = $region58
              $region57: #{tpu_custom_call.1} parent=31 // pred_region
                _
              $region58: #{tpu_custom_call.1} parent=31 // pred_fallthru
                _
            $region32: #{tpu_custom_call.1} parent=27 // pred_fallthru
              _
            // Predicated region
            $region33: #{tpu_custom_call.1} parent=27 // pred_check
              _
            $region34: #{tpu_custom_call.1} parent=27 // pred_check_branch
              %148 = sbr.rel target = $region36
            $region35: #{tpu_custom_call.1} parent=27 // pred_region
              %s150 = ssub.s32 256, 1
              loop: start=0, step=1, limit=1
              $region37: #{tpu_custom_call.1} parent=35 // loop_pre_header
                _
              $region38: #{tpu_custom_call.1} parent=35 // loop_header
                %s152 = sphi 0, %s156
                %p153 = scmp.ge.s32.totalorder %s152, 1
                %s157 = sphi %s142, %s142
                %s158 = sphi %s139, %s139
              $region39: #{tpu_custom_call.1} parent=35 // loop_header_branch
                %155 = sbr.rel (%p153) target = $region43
              $region40: #{tpu_custom_call.1} parent=35 // loop_body
                %v159 = vld [vmem:[%s157] sm:%s150]
                %160 = vst [vmem:[%s158] sm:%s150] %v159
                %v161 = vld [vmem:[%s157 + $0x10] sm:%s150]
                %162 = vst [vmem:[%s158 + $0x8] sm:%s150] %v161
                %v163 = vld [vmem:[%s157 + $0x20] sm:%s150]
                %164 = vst [vmem:[%s158 + $0x10] sm:%s150] %v163
                %v165 = vld [vmem:[%s157 + $0x30] sm:%s150]
                %166 = vst [vmem:[%s158 + $0x18] sm:%s150] %v165
                %v167 = vld [vmem:[%s157 + $0x40] sm:%s150]
                %168 = vst [vmem:[%s158 + $0x20] sm:%s150] %v167
                %v169 = vld [vmem:[%s157 + $0x50] sm:%s150]
                %170 = vst [vmem:[%s158 + $0x28] sm:%s150] %v169
                %v171 = vld [vmem:[%s157 + $0x60] sm:%s150]
                %172 = vst [vmem:[%s158 + $0x30] sm:%s150] %v171
                %v173 = vld [vmem:[%s157 + $0x70] sm:%s150]
                %174 = vst [vmem:[%s158 + $0x38] sm:%s150] %v173
              $region41: #{tpu_custom_call.1} parent=35 // loop_footer
                %s156 = sadd.s32 1, %s152
              $region42: #{tpu_custom_call.1} parent=35 // loop_footer_branch
                %151 = sbr.rel target = $region38
              $region43: #{tpu_custom_call.1} parent=35 // loop_exit
                _
            $region36: #{tpu_custom_call.1} parent=27 // pred_fallthru
              _
          $region28: #{tpu_custom_call.1} parent=23 // pred_fallthru
            _
          %203 = vnop
        $region24: #{tpu_custom_call.1} parent=19 // pred_fallthru
          _
        // Predicated region
        $region59: #{tpu_custom_call.1} parent=19 // pred_check
          %p204 = pneg %p84
        $region60: #{tpu_custom_call.1} parent=19 // pred_check_branch
          %206 = sbr.rel (%p204) target = $region62
        $region61: #{tpu_custom_call.1} parent=19 // pred_region
          %s207 = smul.u32 2, %s17
          %p208 = scmp.lt.s32.totalorder %s207, 3
          %s209 = scalar_select %p208, %s207, 3
          %s210 = scalar_lea.vmem %s3, %s209
          %s211 = smul.u32 2, %s17
        $region62: #{tpu_custom_call.1} parent=19 // pred_fallthru
          _
      $region20: #{tpu_custom_call.1} parent=5 // pred_fallthru
        _
      %p212 = scmp.le.s32.totalorder 1, %s17
      %p213 = scmp.lt.s32.totalorder %s17, 3
      %p214 = pnand %p212, %p213
      %p215 = pneg %p214
      // Predicated region
      $region63: #{tpu_custom_call.1} parent=5 // pred_check
        _
      $region64: #{tpu_custom_call.1} parent=5 // pred_check_branch
        %217 = sbr.rel (%p214) target = $region66
      $region65: #{tpu_custom_call.1} parent=5 // pred_region
        %s218 = ssub.s32 %s17, 1
        %s219 = sand.u32 %s51, 1
        %s220 = sand.u32 %s51, 1
        %s221 = smul.addr %s220, 64
        %s222 = scalar_lea.vmem [#allocation8], %s221
        // Predicated region
        $region67: #{tpu_custom_call.1} parent=65 // pred_check
          %p223 = pneg %p64
        $region68: #{tpu_custom_call.1} parent=65 // pred_check_branch
          %225 = sbr.rel (%p223) target = $region70
        $region69: #{tpu_custom_call.1} parent=65 // pred_region
          _
        $region70: #{tpu_custom_call.1} parent=65 // pred_fallthru
          _
        %p226 = pneg %p38
        %p227 = pneg %p35
        %s228 = sand.u32 %s51, 1
        %s229 = sand.u32 %s51, 1
        %s230 = smul.addr %s229, 64
        %s231 = scalar_lea.vmem [#allocation8], %s230
        %p232 = pneg %p64
        %p233 = pneg %p61
        %s234 = smul.u32 2, %s22
        %p235 = scmp.lt.s32.totalorder %s234, 3
        %s236 = scalar_select %p235, %s234, 3
        %s237 = scalar_lea.vmem %s3, %s236
        %p238 = pneg %p90
        %p239 = pneg %p87
        %p240 = pneg %p111
        %p241 = pneg %p108
        %s242 = smul.u32 2, %s22
        %s243 = smul.u32 2, %s22
        %p244 = scmp.lt.s32.totalorder %s243, 3
        %s245 = scalar_select %p244, %s243, 3
        %s246 = scalar_lea.vmem %s3, %s245
        %s247 = smul.u32 2, %s22
        %p249 = scmp.eq.s32.totalorder %s22, 0
        // Predicated region
        $region71: #{tpu_custom_call.1} parent=65 // pred_check
          %p250 = pneg %p249
        $region72: #{tpu_custom_call.1} parent=65 // pred_check_branch
          %252 = sbr.rel (%p250) target = $region74
        $region73: #{tpu_custom_call.1} parent=65 // pred_region
          %vm253 = vcmask 7168
          %254 = vst.msk [vmem:[#allocation3] sm:$0xff] %vm253, -inf
          %255 = vst.msk [vmem:[#allocation4] sm:$0xff] %vm253, 0.0
          %s256 = sld [smem:[#allocation7]]
          %p257 = scmp.gt.s32.totalorder %s256, 0
          %s258 = scalar_select %p257, %s256, 0
          %p259 = scmp.lt.s32.totalorder %s258, 511
          %s260 = scalar_select %p259, %s258, 511
          %s261 = scalar_lea.vmem %s1, %s260
          %v262 = vld [vmem:[%s261] sm:$0x1]
          %v263 = vadd.f32 %v262, 0.0
          %s264 = sld [smem:[#allocation7 + $0x1]]
          %p265 = scmp.gt.s32.totalorder %s264, 0
          %s266 = scalar_select %p265, %s264, 0
          %p267 = scmp.lt.s32.totalorder %s266, 511
          %s268 = scalar_select %p267, %s266, 511
          %s269 = scalar_lea.vmem %s1, %s268
          %v270 = vld [vmem:[%s269] sm:$0x1]
          %v271 = vadd.f32 %v263, %v270
          %s272 = sld [smem:[#allocation7 + $0x2]]
          %p273 = scmp.gt.s32.totalorder %s272, 0
          %s274 = scalar_select %p273, %s272, 0
          %p275 = scmp.lt.s32.totalorder %s274, 511
          %s276 = scalar_select %p275, %s274, 511
          %s277 = scalar_lea.vmem %s1, %s276
          %v278 = vld [vmem:[%s277] sm:$0x1]
          %v279 = vadd.f32 %v271, %v278
          %s280 = sld [smem:[#allocation7 + $0x3]]
          %p281 = scmp.gt.s32.totalorder %s280, 0
          %s282 = scalar_select %p281, %s280, 0
          %p283 = scmp.lt.s32.totalorder %s282, 511
          %s284 = scalar_select %p283, %s282, 511
          %s285 = scalar_lea.vmem %s1, %s284
          %v286 = vld [vmem:[%s285] sm:$0x1]
          %v287 = vadd.f32 %v279, %v286
          %vm288 = vcmask 516096
          %289 = vst.msk [vmem:[#allocation2] sm:$0x1] %vm288, %v287
          %s290 = sld [smem:[#allocation7 + $0x80]]
          %p291 = scmp.gt.s32.totalorder %s290, 0
          %s292 = scalar_select %p291, %s290, 0
          %p293 = scmp.lt.s32.totalorder %s292, 511
          %s294 = scalar_select %p293, %s292, 511
          %s295 = scalar_lea.vmem %s1, %s294
          %v296 = vld [vmem:[%s295] sm:$0x1]
          %v297 = vadd.f32 %v296, 0.0
          %s298 = sld [smem:[#allocation7 + $0x81]]
          %p299 = scmp.gt.s32.totalorder %s298, 0
          %s300 = scalar_select %p299, %s298, 0
          %p301 = scmp.lt.s32.totalorder %s300, 511
          %s302 = scalar_select %p301, %s300, 511
          %s303 = scalar_lea.vmem %s1, %s302
          %v304 = vld [vmem:[%s303] sm:$0x1]
          %v305 = vadd.f32 %v297, %v304
          %s306 = sld [smem:[#allocation7 + $0x82]]
          %p307 = scmp.gt.s32.totalorder %s306, 0
          %s308 = scalar_select %p307, %s306, 0
          %p309 = scmp.lt.s32.totalorder %s308, 511
          %s310 = scalar_select %p309, %s308, 511
          %s311 = scalar_lea.vmem %s1, %s310
          %v312 = vld [vmem:[%s311] sm:$0x1]
          %v313 = vadd.f32 %v305, %v312
          %s314 = sld [smem:[#allocation7 + $0x83]]
          %p315 = scmp.gt.s32.totalorder %s314, 0
          %s316 = scalar_select %p315, %s314, 0
          %p317 = scmp.lt.s32.totalorder %s316, 511
          %s318 = scalar_select %p317, %s316, 511
          %s319 = scalar_lea.vmem %s1, %s318
          %v320 = vld [vmem:[%s319] sm:$0x1]
          %v321 = vadd.f32 %v313, %v320
          %322 = vst.msk [vmem:[#allocation2 + $0x1] sm:$0x1] %vm288, %v321
          %s323 = sld [smem:[#allocation7 + $0x100]]
          %p324 = scmp.gt.s32.totalorder %s323, 0
          %s325 = scalar_select %p324, %s323, 0
          %p326 = scmp.lt.s32.totalorder %s325, 511
          %s327 = scalar_select %p326, %s325, 511
          %s328 = scalar_lea.vmem %s1, %s327
          %v329 = vld [vmem:[%s328] sm:$0x1]
          %v330 = vadd.f32 %v329, 0.0
          %s331 = sld [smem:[#allocation7 + $0x101]]
          %p332 = scmp.gt.s32.totalorder %s331, 0
          %s333 = scalar_select %p332, %s331, 0
          %p334 = scmp.lt.s32.totalorder %s333, 511
          %s335 = scalar_select %p334, %s333, 511
          %s336 = scalar_lea.vmem %s1, %s335
          %v337 = vld [vmem:[%s336] sm:$0x1]
          %v338 = vadd.f32 %v330, %v337
          %s339 = sld [smem:[#allocation7 + $0x102]]
          %p340 = scmp.gt.s32.totalorder %s339, 0
          %s341 = scalar_select %p340, %s339, 0
          %p342 = scmp.lt.s32.totalorder %s341, 511
          %s343 = scalar_select %p342, %s341, 511
          %s344 = scalar_lea.vmem %s1, %s343
          %v345 = vld [vmem:[%s344] sm:$0x1]
          %v346 = vadd.f32 %v338, %v345
          %s347 = sld [smem:[#allocation7 + $0x103]]
          %p348 = scmp.gt.s32.totalorder %s347, 0
          %s349 = scalar_select %p348, %s347, 0
          %p350 = scmp.lt.s32.totalorder %s349, 511
          %s351 = scalar_select %p350, %s349, 511
          %s352 = scalar_lea.vmem %s1, %s351
          %v353 = vld [vmem:[%s352] sm:$0x1]
          %v354 = vadd.f32 %v346, %v353
          %355 = vst.msk [vmem:[#allocation2 + $0x2] sm:$0x1] %vm288, %v354
          %s356 = sld [smem:[#allocation7 + $0x180]]
          %p357 = scmp.gt.s32.totalorder %s356, 0
          %s358 = scalar_select %p357, %s356, 0
          %p359 = scmp.lt.s32.totalorder %s358, 511
          %s360 = scalar_select %p359, %s358, 511
          %s361 = scalar_lea.vmem %s1, %s360
          %v362 = vld [vmem:[%s361] sm:$0x1]
          %v363 = vadd.f32 %v362, 0.0
          %s364 = sld [smem:[#allocation7 + $0x181]]
          %p365 = scmp.gt.s32.totalorder %s364, 0
          %s366 = scalar_select %p365, %s364, 0
          %p367 = scmp.lt.s32.totalorder %s366, 511
          %s368 = scalar_select %p367, %s366, 511
          %s369 = scalar_lea.vmem %s1, %s368
          %v370 = vld [vmem:[%s369] sm:$0x1]
          %v371 = vadd.f32 %v363, %v370
          %s372 = sld [smem:[#allocation7 + $0x182]]
          %p373 = scmp.gt.s32.totalorder %s372, 0
          %s374 = scalar_select %p373, %s372, 0
          %p375 = scmp.lt.s32.totalorder %s374, 511
          %s376 = scalar_select %p375, %s374, 511
          %s377 = scalar_lea.vmem %s1, %s376
          %v378 = vld [vmem:[%s377] sm:$0x1]
          %v379 = vadd.f32 %v371, %v378
          %s380 = sld [smem:[#allocation7 + $0x183]]
          %p381 = scmp.gt.s32.totalorder %s380, 0
          %s382 = scalar_select %p381, %s380, 0
          %p383 = scmp.lt.s32.totalorder %s382, 511
          %s384 = scalar_select %p383, %s382, 511
          %s385 = scalar_lea.vmem %s1, %s384
          %v386 = vld [vmem:[%s385] sm:$0x1]
          %v387 = vadd.f32 %v379, %v386
          %388 = vst.msk [vmem:[#allocation2 + $0x3] sm:$0x1] %vm288, %v387
          %s389 = sld [smem:[#allocation7 + $0x200]]
          %p390 = scmp.gt.s32.totalorder %s389, 0
          %s391 = scalar_select %p390, %s389, 0
          %p392 = scmp.lt.s32.totalorder %s391, 511
          %s393 = scalar_select %p392, %s391, 511
          %s394 = scalar_lea.vmem %s1, %s393
          %v395 = vld [vmem:[%s394] sm:$0x1]
          %v396 = vadd.f32 %v395, 0.0
          %s397 = sld [smem:[#allocation7 + $0x201]]
          %p398 = scmp.gt.s32.totalorder %s397, 0
          %s399 = scalar_select %p398, %s397, 0
          %p400 = scmp.lt.s32.totalorder %s399, 511
          %s401 = scalar_select %p400, %s399, 511
          %s402 = scalar_lea.vmem %s1, %s401
          %v403 = vld [vmem:[%s402] sm:$0x1]
          %v404 = vadd.f32 %v396, %v403
          %s405 = sld [smem:[#allocation7 + $0x202]]
          %p406 = scmp.gt.s32.totalorder %s405, 0
          %s407 = scalar_select %p406, %s405, 0
          %p408 = scmp.lt.s32.totalorder %s407, 511
          %s409 = scalar_select %p408, %s407, 511
          %s410 = scalar_lea.vmem %s1, %s409
          %v411 = vld [vmem:[%s410] sm:$0x1]
          %v412 = vadd.f32 %v404, %v411
          %s413 = sld [smem:[#allocation7 + $0x203]]
          %p414 = scmp.gt.s32.totalorder %s413, 0
          %s415 = scalar_select %p414, %s413, 0
          %p416 = scmp.lt.s32.totalorder %s415, 511
          %s417 = scalar_select %p416, %s415, 511
          %s418 = scalar_lea.vmem %s1, %s417
          %v419 = vld [vmem:[%s418] sm:$0x1]
          %v420 = vadd.f32 %v412, %v419
          %421 = vst.msk [vmem:[#allocation2 + $0x4] sm:$0x1] %vm288, %v420
          %s422 = sld [smem:[#allocation7 + $0x280]]
          %p423 = scmp.gt.s32.totalorder %s422, 0
          %s424 = scalar_select %p423, %s422, 0
          %p425 = scmp.lt.s32.totalorder %s424, 511
          %s426 = scalar_select %p425, %s424, 511
          %s427 = scalar_lea.vmem %s1, %s426
          %v428 = vld [vmem:[%s427] sm:$0x1]
          %v429 = vadd.f32 %v428, 0.0
          %s430 = sld [smem:[#allocation7 + $0x281]]
          %p431 = scmp.gt.s32.totalorder %s430, 0
          %s432 = scalar_select %p431, %s430, 0
          %p433 = scmp.lt.s32.totalorder %s432, 511
          %s434 = scalar_select %p433, %s432, 511
          %s435 = scalar_lea.vmem %s1, %s434
          %v436 = vld [vmem:[%s435] sm:$0x1]
          %v437 = vadd.f32 %v429, %v436
          %s438 = sld [smem:[#allocation7 + $0x282]]
          %p439 = scmp.gt.s32.totalorder %s438, 0
          %s440 = scalar_select %p439, %s438, 0
          %p441 = scmp.lt.s32.totalorder %s440, 511
          %s442 = scalar_select %p441, %s440, 511
          %s443 = scalar_lea.vmem %s1, %s442
          %v444 = vld [vmem:[%s443] sm:$0x1]
          %v445 = vadd.f32 %v437, %v444
          %s446 = sld [smem:[#allocation7 + $0x283]]
          %p447 = scmp.gt.s32.totalorder %s446, 0
          %s448 = scalar_select %p447, %s446, 0
          %p449 = scmp.lt.s32.totalorder %s448, 511
          %s450 = scalar_select %p449, %s448, 511
          %s451 = scalar_lea.vmem %s1, %s450
          %v452 = vld [vmem:[%s451] sm:$0x1]
          %v453 = vadd.f32 %v445, %v452
          %454 = vst.msk [vmem:[#allocation2 + $0x5] sm:$0x1] %vm288, %v453
          %s455 = sld [smem:[#allocation7 + $0x300]]
          %p456 = scmp.gt.s32.totalorder %s455, 0
          %s457 = scalar_select %p456, %s455, 0
          %p458 = scmp.lt.s32.totalorder %s457, 511
          %s459 = scalar_select %p458, %s457, 511
          %s460 = scalar_lea.vmem %s1, %s459
          %v461 = vld [vmem:[%s460] sm:$0x1]
          %v462 = vadd.f32 %v461, 0.0
          %s463 = sld [smem:[#allocation7 + $0x301]]
          %p464 = scmp.gt.s32.totalorder %s463, 0
          %s465 = scalar_select %p464, %s463, 0
          %p466 = scmp.lt.s32.totalorder %s465, 511
          %s467 = scalar_select %p466, %s465, 511
          %s468 = scalar_lea.vmem %s1, %s467
          %v469 = vld [vmem:[%s468] sm:$0x1]
          %v470 = vadd.f32 %v462, %v469
          %s471 = sld [smem:[#allocation7 + $0x302]]
          %p472 = scmp.gt.s32.totalorder %s471, 0
          %s473 = scalar_select %p472, %s471, 0
          %p474 = scmp.lt.s32.totalorder %s473, 511
          %s475 = scalar_select %p474, %s473, 511
          %s476 = scalar_lea.vmem %s1, %s475
          %v477 = vld [vmem:[%s476] sm:$0x1]
          %v478 = vadd.f32 %v470, %v477
          %s479 = sld [smem:[#allocation7 + $0x303]]
          %p480 = scmp.gt.s32.totalorder %s479, 0
          %s481 = scalar_select %p480, %s479, 0
          %p482 = scmp.lt.s32.totalorder %s481, 511
          %s483 = scalar_select %p482, %s481, 511
          %s484 = scalar_lea.vmem %s1, %s483
          %v485 = vld [vmem:[%s484] sm:$0x1]
          %v486 = vadd.f32 %v478, %v485
          %487 = vst.msk [vmem:[#allocation2 + $0x6] sm:$0x1] %vm288, %v486
          %s488 = sld [smem:[#allocation7 + $0x380]]
          %p489 = scmp.gt.s32.totalorder %s488, 0
          %s490 = scalar_select %p489, %s488, 0
          %p491 = scmp.lt.s32.totalorder %s490, 511
          %s492 = scalar_select %p491, %s490, 511
          %s493 = scalar_lea.vmem %s1, %s492
          %v494 = vld [vmem:[%s493] sm:$0x1]
          %v495 = vadd.f32 %v494, 0.0
          %s496 = sld [smem:[#allocation7 + $0x381]]
          %p497 = scmp.gt.s32.totalorder %s496, 0
          %s498 = scalar_select %p497, %s496, 0
          %p499 = scmp.lt.s32.totalorder %s498, 511
          %s500 = scalar_select %p499, %s498, 511
          %s501 = scalar_lea.vmem %s1, %s500
          %v502 = vld [vmem:[%s501] sm:$0x1]
          %v503 = vadd.f32 %v495, %v502
          %s504 = sld [smem:[#allocation7 + $0x382]]
          %p505 = scmp.gt.s32.totalorder %s504, 0
          %s506 = scalar_select %p505, %s504, 0
          %p507 = scmp.lt.s32.totalorder %s506, 511
          %s508 = scalar_select %p507, %s506, 511
          %s509 = scalar_lea.vmem %s1, %s508
          %v510 = vld [vmem:[%s509] sm:$0x1]
          %v511 = vadd.f32 %v503, %v510
          %s512 = sld [smem:[#allocation7 + $0x383]]
          %p513 = scmp.gt.s32.totalorder %s512, 0
          %s514 = scalar_select %p513, %s512, 0
          %p515 = scmp.lt.s32.totalorder %s514, 511
          %s516 = scalar_select %p515, %s514, 511
          %s517 = scalar_lea.vmem %s1, %s516
          %v518 = vld [vmem:[%s517] sm:$0x1]
          %v519 = vadd.f32 %v511, %v518
          %520 = vst.msk [vmem:[#allocation2 + $0x7] sm:$0x1] %vm288, %v519
        $region74: #{tpu_custom_call.1} parent=65 // pred_fallthru
          _
        %v521 = vld [vmem:[#allocation2] sm:$0xff]
        %v522 = vpack.c.bf16 %v521, %v521
        %v523 = vld [vmem:[%s222] sm:$0xff]
        %v524 = vld [vmem:[%s222 + $0x8] sm:$0xff]
        %v525 = vld [vmem:[%s222 + $0x10] sm:$0xff]
        %v526 = vld [vmem:[%s222 + $0x18] sm:$0xff]
        %v527 = vld [vmem:[%s222 + $0x20] sm:$0xff]
        %v528 = vld [vmem:[%s222 + $0x28] sm:$0xff]
        %v529 = vld [vmem:[%s222 + $0x30] sm:$0xff]
        %v530 = vld [vmem:[%s222 + $0x38] sm:$0xff]
        %v531 = vld [vmem:[%s246] sm:$0x3]
        %v533 = vlaneseq
        %v534 = vshrl.u32 %v533, 7
        %v535 = vsub.s32 0, %v534
        %v536 = vrot.slane %v531, %v535
        %v537 = vlaneseq
        %v538 = vshrl.u32 %v537, 7
        %v539 = vsub.s32 1, %v538
        %v540 = vrot.slane %v531, %v539
        %v551 = vunpack.c.l.b16 %v523
        %v552 = vunpack.c.h.b16 %v523
        %v553 = vunpack.c.l.b16 %v524
        %v554 = vunpack.c.h.b16 %v524
        %v555 = vunpack.c.l.b16 %v525
        %v556 = vunpack.c.h.b16 %v525
        %v557 = vunpack.c.l.b16 %v526
        %v558 = vunpack.c.h.b16 %v526
        %v559 = vunpack.c.l.b16 %v527
        %v560 = vunpack.c.h.b16 %v527
        %v561 = vunpack.c.l.b16 %v528
        %v562 = vunpack.c.h.b16 %v528
        %v563 = vunpack.c.l.b16 %v529
        %v564 = vunpack.c.h.b16 %v529
        %v565 = vunpack.c.l.b16 %v530
        %v566 = vunpack.c.h.b16 %v530
        %v567 = vpack.c.b16 %v553, %v551
        %v568 = vpack.c.b16 %v554, %v552
        %v569 = vpack.c.b16 %v557, %v555
        %v570 = vpack.c.b16 %v558, %v556
        %v571 = vpack.c.b16 %v561, %v559
        %v572 = vpack.c.b16 %v562, %v560
        %v573 = vpack.c.b16 %v565, %v563
        %v574 = vpack.c.b16 %v566, %v564
        %vm583 = vcmask 523264
        %v585 = vsel %vm583, %v522, 0
        %587 = vmatprep.subr.bf16.mxu0 0
        %588 = vmatpush1.bf16.msra.mxu0 0
        %589 = vmatprep.subr.bf16.mxu0 0
        %590 = vmatpush1.bf16.msra.mxu0 0
        %591 = vmatprep.subr.bf16.mxu0 0
        %592 = vmatpush1.bf16.msra.mxu0 0
        %593 = vmatprep.subr.bf16.mxu0 0
        %594 = vmatpush1.bf16.msra.mxu0 0
        %595 = vmatprep.subr.bf16.mxu0 %v574
        %596 = vmatpush1.bf16.msra.mxu0 %v573
        %597 = vmatprep.subr.bf16.mxu0 %v572
        %598 = vmatpush1.bf16.msra.mxu0 %v571
        %599 = vmatprep.subr.bf16.mxu0 %v570
        %600 = vmatpush1.bf16.msra.mxu0 %v569
        %601 = vmatprep.subr.bf16.mxu0 %v568
        %602 = vmatpush1.bf16.msra.mxu0 %v567
        %603 = vmatprep.subr.bf16.mxu0 0
        %604 = vmatpush2.bf16.msra.mxu0 0
        %605 = vmatprep.subr.bf16.mxu0 0
        %606 = vmatpush2.bf16.msra.mxu0 0
        %607 = vmatprep.subr.bf16.mxu0 0
        %608 = vmatpush2.bf16.msra.mxu0 0
        %609 = vmatprep.subr.bf16.mxu0 0
        %610 = vmatpush2.bf16.msra.mxu0 0
        %611 = vmatprep.subr.bf16.mxu0 0
        %612 = vmatpush2.bf16.msra.mxu0 0
        %613 = vmatprep.subr.bf16.mxu0 0
        %614 = vmatpush2.bf16.msra.mxu0 0
        %615 = vmatprep.subr.bf16.mxu0 0
        %616 = vmatpush2.bf16.msra.mxu0 0
        %617 = vmatprep.subr.bf16.mxu0 0
        %618 = vmatpush2.bf16.msra.mxu0 0
        %619 = vmatprep.mubr.bf16.mxu0 0
        %620 = vmatmul.mubr.bf16.gmra.mxu0 %v585
        %v621 = vpop.f32.mrf.mxu0
        %v622 = vadd.f32 %v536, %v621
        %v623 = vpop.f32.mrf.mxu0
        %v624 = vadd.f32 %v540, %v623
        %v625 = vpop.f32.mrf.mxu0
        %v626 = vpop.f32.mrf.mxu0
        %627 = vdwg.mxu0
        %s628 = smul.u32 %s22, 2
        %s629 = smul.addr %s628, 8
        %s630 = scalar_lea.vmem [#allocation5], %s629
        %631 = vst [vmem:[%s630] sm:$0xff] %v622
        %632 = vst [vmem:[%s630 + $0x8] sm:$0xff] %v624
        %v633 = vmax.f32 %v622, %v624
        %634 = vmax.xlane.f32.xlu0 %v633
        %v635 = vpop.xlane.xlu0 %634
        %v636 = vld [vmem:[#allocation3] sm:$0xff]
        %v637 = vmax.f32 %v636, %v635
        %v638 = vld [vmem:[#allocation4] sm:$0xff]
        %v639 = vsub.f32 %v636, %v637
        %v640 = vmul.f32 %v639, 1.442695
        %v641 = vpow.pop %v640
        %v642 = vmul.f32 %v638, %v641
        %644 = vset.pattern.permute.xlu0 0
        %645 = vperm.xlu0 %644, %v637
        %v646 = vpop.permute.xlu0 %645
        %v648 = vsub.f32 %v622, %v646
        %v649 = vsub.f32 %v624, %v646
        %v650 = vmul.f32 %v648, 1.442695
        %v651 = vpow.pop %v650
        %v652 = vmul.f32 %v649, 1.442695
        %v653 = vpow.pop %v652
        %v654 = vadd.f32 %v651, %v653
        %655 = vadd.xlane.f32.xlu0 %v654
        %v656 = vpop.xlane.xlu0 %655
        %v657 = vadd.f32 %v642, %v656
        %vm658 = vcmask 7168
        %659 = vst.msk [vmem:[#allocation4] sm:$0xff] %vm658, %v657
        %660 = vst.msk [vmem:[#allocation3] sm:$0xff] %vm658, %v637
        %p661 = scmp.eq.s32.totalorder %s22, 1
        // Predicated region
        $region75: #{tpu_custom_call.1} parent=65 // pred_check
          %p662 = pneg %p661
        $region76: #{tpu_custom_call.1} parent=65 // pred_check_branch
          %664 = sbr.rel (%p662) target = $region78
        $region77: #{tpu_custom_call.1} parent=65 // pred_region
          %v665 = vld [vmem:[#allocation3] sm:$0xff]
          %v666 = vld [vmem:[#allocation4] sm:$0xff]
          %v667 = vlog2.pop %v666
          %v668 = vmul.f32 %v667, 0.6931472
          %v669 = vadd.f32 %v665, %v668
          %v670 = vld [vmem:[#allocation5] sm:$0xff]
          %v671 = vld [vmem:[#allocation5 + $0x8] sm:$0xff]
          %673 = vset.pattern.permute.xlu0 0
          %674 = vperm.xlu0 %673, %v669
          %v675 = vpop.permute.xlu0 %674
          %v677 = vsub.f32 %v670, %v675
          %v678 = vsub.f32 %v671, %v675
          %679 = vst [vmem:[#allocation9] sm:$0xff] %v677
          %680 = vst [vmem:[#allocation9 + $0x8] sm:$0xff] %v678
          %s681 = scalar_lea.vmem [#allocation5], 16
          %v682 = vld [vmem:[%s681] sm:$0xff]
          %v683 = vld [vmem:[%s681 + $0x8] sm:$0xff]
          %v684 = vsub.f32 %v682, %v675
          %v685 = vsub.f32 %v683, %v675
          %686 = vst [vmem:[#allocation9 + $0x10] sm:$0xff] %v684
          %687 = vst [vmem:[#allocation9 + $0x18] sm:$0xff] %v685
        $region78: #{tpu_custom_call.1} parent=65 // pred_fallthru
          _
        // Predicated region
        $region79: #{tpu_custom_call.1} parent=65 // pred_check
          %p688 = pneg %p108
        $region80: #{tpu_custom_call.1} parent=65 // pred_check_branch
          %690 = sbr.rel (%p688) target = $region82
        $region81: #{tpu_custom_call.1} parent=65 // pred_region
          %s692 = ssub.s32 512, 512
          %693 = vsyncadd [#allocation10], %s692
          %s695 = sshll.u32 [#allocation9], 4
          %s696 = int_to_ptr.vmem [resolvable:$true] %s695
          %698 = dma.vmem_to_hbm [thread:$0]  %s696, 512, %s4, [#allocation10]
        $region82: #{tpu_custom_call.1} parent=65 // pred_fallthru
          _
        // Predicated region
        $region83: #{tpu_custom_call.1} parent=65 // pred_check
          %p699 = pneg %p108
        $region84: #{tpu_custom_call.1} parent=65 // pred_check_branch
          %701 = sbr.rel (%p699) target = $region86
        $region85: #{tpu_custom_call.1} parent=65 // pred_region
          %702 = dma.done [#allocation10], 512
        $region86: #{tpu_custom_call.1} parent=65 // pred_fallthru
          _
      $region66: #{tpu_custom_call.1} parent=5 // pred_fallthru
        _
      %p703 = scmp.le.s32.totalorder 2, %s17
      // Predicated region
      $region87: #{tpu_custom_call.1} parent=5 // pred_check
        %p704 = pneg %p703
      $region88: #{tpu_custom_call.1} parent=5 // pred_check_branch
        %706 = sbr.rel (%p704) target = $region90
      $region89: #{tpu_custom_call.1} parent=5 // pred_region
        %s707 = ssub.s32 %s17, 2
      $region90: #{tpu_custom_call.1} parent=5 // pred_fallthru
        _
    $region6: #{tpu_custom_call.1} parent=1 // loop_footer
      %s21 = sadd.s32 1, %s17
    $region7: #{tpu_custom_call.1} parent=1 // loop_footer_branch
      %16 = sbr.rel target = $region3
    $region8: #{tpu_custom_call.1} parent=1 // loop_exit
      _
    %708 = vsyncpa [#allocation10], 1
    %s709 = scalar_lea.sflag [#allocation10], 1
    %710 = vsyncpa %s709, 1

</llo_original>
